<compile_context>
chip_gen: v7x
topology: tpu7x:2x2x1
jax: 0.10.0
libtpu: 0.0.40
codegen_flags: <defaults>
</compile_context>

<pallas_src>
import functools

import jax
import jax.numpy as jnp
from jax.experimental import pallas as pl
from jax.experimental.pallas import tpu as pltpu

LANE = 128
SUBLANE = 8
TR_MAX = 1024          # rows per tile: 1024*128 f32 = 512 KiB per input block
NCORES = 2             # leading parallel grid axis (megacore split on v7x)


def _cdiv(a, b):
    return -(-a // b)


def _round_up(x, m):
    return ((x + m - 1) // m) * m


def _focal_loss_kernel(pred_ref, tgt_ref, loss_ref, pos_ref, *, alpha, gamma, tr):
    # pred_ref / tgt_ref: (tr, 128) f32 tiles. Padding carries tgt == -1, pred == 0.5.
    # loss_ref / pos_ref: (1, 8, 128) f32 per-core accumulators (output blocks,
    #                     resident across the inner "arbitrary" reduction axis).
    i = pl.program_id(1)

    @pl.when(i == 0)
    def _():
        loss_ref[...] = jnp.zeros_like(loss_ref)
        pos_ref[...] = jnp.zeros_like(pos_ref)

    p = pred_ref[...]
    t = tgt_ref[...]          # labels == anchor_state (last column of y_true)
    q = 1.0 - p
    one_minus_t = 1.0 - t

    valid = t != -1.0         # anchor_state != -1
    pos = t == 1.0            # anchor_state == 1

    # BCELoss(reduction='none') with PyTorch's internal log clamp at -100.
    # These two logs are the only per-element transcendentals for gamma in {0,1,2}.
    log_p = jnp.maximum(jnp.log(p), -100.0)
    log_q = jnp.maximum(jnp.log(q), -100.0)
    bce = -(t * log_p + one_minus_t * log_q)

    # Focal weight. Default gamma=2.0 uses VPU multiplies only (no pow/exp).
    if gamma == 2.0:
        p_g = p * p
        q_g = q * q
    elif gamma == 1.0:
        p_g = p
        q_g = q
    elif gamma == 0.0:
        p_g = jnp.ones_like(p)
        q_g = jnp.ones_like(p)
    else:
        # General gamma: reuse the logs already computed for BCE (2 extra EUP exps).
        p_g = jnp.exp(gamma * log_p)
        q_g = jnp.exp(gamma * log_q)
    fw = t * alpha * q_g + one_minus_t * (1.0 - alpha) * p_g

    loss_tile = jnp.where(valid, fw * bce, 0.0)          # (tr, 128)
    pos_tile = jnp.where(pos, 1.0, 0.0)

    # Fold rows onto the sublane axis: (tr,128) -> (tr//8, 8, 128) -> sum(axis=0).
    # This is layout-preserving + pure vreg-wise VPU adds; the expensive cross-lane
    # reduction happens once, outside the kernel, on the tiny (NCORES,8,128) outputs.
    loss_part = loss_tile.reshape(tr // SUBLANE, SUBLANE, LANE).sum(axis=0)
    pos_part = pos_tile.reshape(tr // SUBLANE, SUBLANE, LANE).sum(axis=0)
    loss_ref[...] += loss_part[None]
    pos_ref[...] += pos_part[None]


def focal_loss(y_pred, y_true, alpha=0.25, gamma=2.0, tile_rows=TR_MAX):
    """y_pred: (N, 1) probabilities; y_true: (N, C), last column in {-1, 0, 1}."""
    pred = y_pred.reshape(-1).astype(jnp.float32)
    tgt = y_true[:, -1].astype(jnp.float32)
    n = pred.shape[0]

    # Adaptive tiling: tr rows per block (multiple of 8), NCORES*tiles_per_core blocks
    # exactly covering the padded array (no partial blocks -> no in-kernel OOB masking).
    rows_min = _cdiv(n, LANE)
    tr0 = min(tile_rows, _round_up(_cdiv(rows_min, NCORES), SUBLANE))
    tiles_per_core = _cdiv(rows_min, NCORES * tr0)
    tr = _round_up(_cdiv(rows_min, NCORES * tiles_per_core), SUBLANE)
    rows_pad = NCORES * tiles_per_core * tr
    n_pad = rows_pad * LANE

    if n_pad != n:
        # Padded slots: tgt = -1 (excluded from loss and normalizer), pred = 0.5 (log-safe).
        pred = jnp.pad(pred, (0, n_pad - n), constant_values=0.5)
        tgt = jnp.pad(tgt, (0, n_pad - n), constant_values=-1.0)
    pred2d = pred.reshape(rows_pad, LANE)
    tgt2d = tgt.reshape(rows_pad, LANE)

    n_trans = 2 if gamma in (0.0, 1.0, 2.0) else 4
    cost = pl.CostEstimate(
        flops=18 * n_pad,
        transcendentals=n_trans * n_pad,
        bytes_accessed=2 * n_pad * 4 + 2 * NCORES * SUBLANE * LANE * 4,
    )

    out_loss, out_pos = pl.pallas_call(
        functools.partial(_focal_loss_kernel, alpha=alpha, gamma=gamma, tr=tr),
        out_shape=(
            jax.ShapeDtypeStruct((NCORES, SUBLANE, LANE), jnp.float32),
            jax.ShapeDtypeStruct((NCORES, SUBLANE, LANE), jnp.float32),
        ),
        grid_spec=pltpu.PrefetchScalarGridSpec(
            num_scalar_prefetch=0,
            grid=(NCORES, tiles_per_core),
            in_specs=[
                pl.BlockSpec((tr, LANE), lambda c, i: (c * tiles_per_core + i, 0)),
                pl.BlockSpec((tr, LANE), lambda c, i: (c * tiles_per_core + i, 0)),
            ],
            out_specs=[
                pl.BlockSpec((1, SUBLANE, LANE), lambda c, i: (c, 0, 0)),
                pl.BlockSpec((1, SUBLANE, LANE), lambda c, i: (c, 0, 0)),
            ],
        ),
        compiler_params=pltpu.CompilerParams(
            dimension_semantics=("parallel", "arbitrary"),
        ),
        cost_estimate=cost,
    )(pred2d, tgt2d)

    # Tiny final reduction (2*8*128 elems) + normalize, outside the kernel.
    loss_all = jnp.sum(out_loss)
    normalizer = jnp.maximum(jnp.sum(out_pos), 1.0)
    return loss_all / normalizer


def _focal_loss_ref(y_pred, y_true, alpha=0.25, gamma=2.0):
    """Pure-JAX reference (masked-sum formulation of the PyTorch module)."""
    p = y_pred.reshape(-1).astype(jnp.float32)
    t = y_true[:, -1].astype(jnp.float32)
    valid = t != -1.0
    fw = t * alpha * (1.0 - p) ** gamma + (1.0 - t) * (1.0 - alpha) * p ** gamma
    bce = -(t * jnp.maximum(jnp.log(p), -100.0)
            + (1.0 - t) * jnp.maximum(jnp.log(1.0 - p), -100.0))
    loss_all = jnp.sum(jnp.where(valid, fw * bce, 0.0))
    normalizer = jnp.maximum(jnp.sum(t == 1.0).astype(jnp.float32), 1.0)
    return loss_all / normalizer


if __name__ == "__main__":
    key = jax.random.PRNGKey(0)
    k1, k2, k3, k4 = jax.random.split(key, 4)

    # Test 1: small case, default alpha/gamma (single tile per core).
    N1 = 256
    y_pred1 = jax.nn.sigmoid(jax.random.normal(k1, (N1, 1), dtype=jnp.float32))
    state1 = jax.random.randint(k2, (N1,), minval=-1, maxval=2).astype(jnp.float32)
    y_true1 = jnp.stack([jnp.zeros((N1,), jnp.float32), state1], axis=1)
    out1 = focal_loss(y_pred1, y_true1)
    jax.block_until_ready(out1)
    ref1 = _focal_loss_ref(y_pred1, y_true1)
    assert jnp.allclose(out1, ref1, rtol=1e-5, atol=1e-5), (out1, ref1)

    # Test 2: ragged size with small tiles to exercise the multi-tile accumulation path.
    N2 = 5000
    y_pred2 = jax.nn.sigmoid(jax.random.normal(k3, (N2, 1), dtype=jnp.float32))
    state2 = jax.random.randint(k4, (N2,), minval=-1, maxval=2).astype(jnp.float32)
    y_true2 = jnp.stack([jnp.zeros((N2,), jnp.float32), state2], axis=1)
    out2 = focal_loss(y_pred2, y_true2, tile_rows=8)
    jax.block_until_ready(out2)
    ref2 = _focal_loss_ref(y_pred2, y_true2)
    assert jnp.allclose(out2, ref2, rtol=1e-5, atol=1e-5), (out2, ref2)

    # Test 3: non-default gamma (general exp path that reuses the BCE logs).
    out3 = focal_loss(y_pred1, y_true1, alpha=0.5, gamma=1.5)
    jax.block_until_ready(out3)
    ref3 = _focal_loss_ref(y_pred1, y_true1, alpha=0.5, gamma=1.5)
    assert jnp.allclose(out3, ref3, rtol=1e-5, atol=1e-5), (out3, ref3)

    print("KERNEL_OK")
</pallas_src>

<mosaic_0001>
module attributes {stable_mosaic.version = 11 : i64} {
  func.func @_focal_loss_kernel(%arg0: i32, %arg1: i32, %arg2: memref<8x128xf32, #tpu.memory_space<vmem>>, %arg3: memref<8x128xf32, #tpu.memory_space<vmem>>, %arg4: memref<1x8x128xf32, #tpu.memory_space<vmem>>, %arg5: memref<1x8x128xf32, #tpu.memory_space<vmem>>) attributes {dimension_semantics = [#tpu.dimension_semantics<parallel>, #tpu.dimension_semantics<arbitrary>], iteration_bounds = array<i64: 2, 1>, scalar_prefetch = 0 : i64, scratch_operands = 0 : i64, tpu.core_type = #tpu.core_type<tc>, window_params = [{transform_indices = @transform_0, window_bounds = array<i64: 8, 128>}, {transform_indices = @transform_1, window_bounds = array<i64: 8, 128>}, {transform_indices = @transform_2, window_bounds = array<i64: 1, 8, 128>}, {transform_indices = @transform_3, window_bounds = array<i64: 1, 8, 128>}]} {
    %c0_i32 = arith.constant 0 : i32
    %0 = arith.cmpi eq, %arg1, %c0_i32 : i32
    %1 = arith.extui %0 : i1 to i32
    %c0_i32_0 = arith.constant 0 : i32
    %2 = arith.cmpi ne, %1, %c0_i32_0 : i32
    scf.if %2 {
      %cst_29 = arith.constant 0.000000e+00 : f32
      %51 = vector.broadcast %cst_29 : f32 to vector<1x8x128xf32>
      %c0_30 = arith.constant 0 : index
      %c0_31 = arith.constant 0 : index
      %c0_32 = arith.constant 0 : index
      %52 = vector.load %arg4[%c0_30, %c0_31, %c0_32] : memref<1x8x128xf32, #tpu.memory_space<vmem>>, vector<1x8x128xf32>
      tpu.vector_store %arg4[%c0_30, %c0_31, %c0_32], %51 {strides = array<i32>} : memref<1x8x128xf32, #tpu.memory_space<vmem>>, vector<1x8x128xf32>,
      %cst_33 = arith.constant 0.000000e+00 : f32
      %53 = vector.broadcast %cst_33 : f32 to vector<1x8x128xf32>
      %c0_34 = arith.constant 0 : index
      %c0_35 = arith.constant 0 : index
      %c0_36 = arith.constant 0 : index
      %54 = vector.load %arg5[%c0_34, %c0_35, %c0_36] : memref<1x8x128xf32, #tpu.memory_space<vmem>>, vector<1x8x128xf32>
      tpu.vector_store %arg5[%c0_34, %c0_35, %c0_36], %53 {strides = array<i32>} : memref<1x8x128xf32, #tpu.memory_space<vmem>>, vector<1x8x128xf32>,
    } else {
    }
    %c0 = arith.constant 0 : index
    %c0_1 = arith.constant 0 : index
    %3 = vector.load %arg2[%c0, %c0_1] : memref<8x128xf32, #tpu.memory_space<vmem>>, vector<8x128xf32>
    %c0_2 = arith.constant 0 : index
    %c0_3 = arith.constant 0 : index
    %4 = vector.load %arg3[%c0_2, %c0_3] : memref<8x128xf32, #tpu.memory_space<vmem>>, vector<8x128xf32>
    %cst = arith.constant 1.000000e+00 : f32
    %5 = vector.broadcast %cst : f32 to vector<8x128xf32>
    %6 = arith.subf %5, %3 : vector<8x128xf32>
    %cst_4 = arith.constant 1.000000e+00 : f32
    %7 = vector.broadcast %cst_4 : f32 to vector<8x128xf32>
    %8 = arith.subf %7, %4 : vector<8x128xf32>
    %cst_5 = arith.constant -1.000000e+00 : f32
    %9 = vector.broadcast %cst_5 : f32 to vector<8x128xf32>
    %10 = arith.cmpf one, %4, %9 : vector<8x128xf32>
    %cst_6 = arith.constant 1.000000e+00 : f32
    %11 = vector.broadcast %cst_6 : f32 to vector<8x128xf32>
    %12 = arith.cmpf oeq, %4, %11 : vector<8x128xf32>
    %13 = math.log %3 : vector<8x128xf32>
    %cst_7 = arith.constant -1.000000e+02 : f32
    %14 = vector.broadcast %cst_7 : f32 to vector<8x128xf32>
    %15 = arith.maximumf %13, %14 : vector<8x128xf32>
    %16 = math.log %6 : vector<8x128xf32>
    %cst_8 = arith.constant -1.000000e+02 : f32
    %17 = vector.broadcast %cst_8 : f32 to vector<8x128xf32>
    %18 = arith.maximumf %16, %17 : vector<8x128xf32>
    %19 = arith.mulf %4, %15 : vector<8x128xf32>
    %20 = arith.mulf %8, %18 : vector<8x128xf32>
    %21 = arith.addf %19, %20 : vector<8x128xf32>
    %cst_9 = arith.constant 0.000000e+00 : f32
    %22 = vector.broadcast %cst_9 : f32 to vector<8x128xf32>
    %23 = arith.subf %22, %21 : vector<8x128xf32>
    %24 = arith.mulf %3, %3 : vector<8x128xf32>
    %25 = arith.mulf %6, %6 : vector<8x128xf32>
    %cst_10 = arith.constant 2.500000e-01 : f32
    %26 = vector.broadcast %cst_10 : f32 to vector<8x128xf32>
    %27 = arith.mulf %4, %26 : vector<8x128xf32>
    %28 = arith.mulf %27, %25 : vector<8x128xf32>
    %cst_11 = arith.constant 7.500000e-01 : f32
    %29 = vector.broadcast %cst_11 : f32 to vector<8x128xf32>
    %30 = arith.mulf %8, %29 : vector<8x128xf32>
    %31 = arith.mulf %30, %24 : vector<8x128xf32>
    %32 = arith.addf %28, %31 : vector<8x128xf32>
    %33 = arith.mulf %32, %23 : vector<8x128xf32>
    %cst_12 = arith.constant 0.000000e+00 : f32
    %34 = vector.broadcast %cst_12 : f32 to vector<8x128xf32>
    %35 = arith.select %10, %33, %34 : vector<8x128xi1>, vector<8x128xf32>
    %cst_13 = arith.constant 1.000000e+00 : f32
    %cst_14 = arith.constant 0.000000e+00 : f32
    %36 = vector.broadcast %cst_13 : f32 to vector<8x128xf32>
    %37 = vector.broadcast %cst_14 : f32 to vector<8x128xf32>
    %38 = arith.select %12, %36, %37 : vector<8x128xi1>, vector<8x128xf32>
    %39 = vector.shape_cast %35 : vector<8x128xf32> to vector<1x8x128xf32>
    %cst_15 = arith.constant dense<0.000000e+00> : vector<8x128xf32>
    %40 = vector.multi_reduction <add>, %39, %cst_15 [0] : vector<1x8x128xf32> to vector<8x128xf32>
    %41 = vector.shape_cast %38 : vector<8x128xf32> to vector<1x8x128xf32>
    %cst_16 = arith.constant dense<0.000000e+00> : vector<8x128xf32>
    %42 = vector.multi_reduction <add>, %41, %cst_16 [0] : vector<1x8x128xf32> to vector<8x128xf32>
    %c0_17 = arith.constant 0 : index
    %c0_18 = arith.constant 0 : index
    %c0_19 = arith.constant 0 : index
    %43 = vector.load %arg4[%c0_17, %c0_18, %c0_19] : memref<1x8x128xf32, #tpu.memory_space<vmem>>, vector<1x8x128xf32>
    %44 = vector.shape_cast %40 : vector<8x128xf32> to vector<1x8x128xf32>
    %45 = arith.addf %43, %44 : vector<1x8x128xf32>
    %c0_20 = arith.constant 0 : index
    %c0_21 = arith.constant 0 : index
    %c0_22 = arith.constant 0 : index
    %46 = vector.load %arg4[%c0_20, %c0_21, %c0_22] : memref<1x8x128xf32, #tpu.memory_space<vmem>>, vector<1x8x128xf32>
    tpu.vector_store %arg4[%c0_20, %c0_21, %c0_22], %45 {strides = array<i32>} : memref<1x8x128xf32, #tpu.memory_space<vmem>>, vector<1x8x128xf32>,
    %c0_23 = arith.constant 0 : index
    %c0_24 = arith.constant 0 : index
    %c0_25 = arith.constant 0 : index
    %47 = vector.load %arg5[%c0_23, %c0_24, %c0_25] : memref<1x8x128xf32, #tpu.memory_space<vmem>>, vector<1x8x128xf32>
    %48 = vector.shape_cast %42 : vector<8x128xf32> to vector<1x8x128xf32>
    %49 = arith.addf %47, %48 : vector<1x8x128xf32>
    %c0_26 = arith.constant 0 : index
    %c0_27 = arith.constant 0 : index
    %c0_28 = arith.constant 0 : index
    %50 = vector.load %arg5[%c0_26, %c0_27, %c0_28] : memref<1x8x128xf32, #tpu.memory_space<vmem>>, vector<1x8x128xf32>
    tpu.vector_store %arg5[%c0_26, %c0_27, %c0_28], %49 {strides = array<i32>} : memref<1x8x128xf32, #tpu.memory_space<vmem>>, vector<1x8x128xf32>,
    return
  }
  func.func @transform_0(%arg0: i32, %arg1: i32) -> (i32, i32) {
    %c1_i32 = arith.constant 1 : i32
    %0 = arith.muli %arg0, %c1_i32 : i32
    %1 = arith.addi %0, %arg1 : i32
    %c0_i32 = arith.constant 0 : i32
    %c0_i32_0 = arith.constant 0 : i32
    return %1, %c0_i32 : i32, i32
  }
  func.func @transform_1(%arg0: i32, %arg1: i32) -> (i32, i32) {
    %c1_i32 = arith.constant 1 : i32
    %0 = arith.muli %arg0, %c1_i32 : i32
    %1 = arith.addi %0, %arg1 : i32
    %c0_i32 = arith.constant 0 : i32
    %c0_i32_0 = arith.constant 0 : i32
    return %1, %c0_i32 : i32, i32
  }
  func.func @transform_2(%arg0: i32, %arg1: i32) -> (i32, i32, i32) {
    %c0_i32 = arith.constant 0 : i32
    %c0_i32_0 = arith.constant 0 : i32
    %c0_i32_1 = arith.constant 0 : i32
    return %arg0, %c0_i32, %c0_i32_0 : i32, i32, i32
  }
  func.func @transform_3(%arg0: i32, %arg1: i32) -> (i32, i32, i32) {
    %c0_i32 = arith.constant 0 : i32
    %c0_i32_0 = arith.constant 0 : i32
    %c0_i32_1 = arith.constant 0 : i32
    return %arg0, %c0_i32, %c0_i32_0 : i32, i32, i32
  }
}

</mosaic_0001>

<llo_original>
// kernel: tpu_custom_call.1
$region0: #{tpu_custom_call.1}
  #allocation0 [shape = 'u32[]', space=smem, size = 0x4, offset = 0x4, fixed_abs, tag = 'smem constant byte address 0x4 - core index']
  #allocation1 [shape = 'u32[144,128]{1,0:T(1,128)}', space=vmem, size = 0x12000, scoped, tag = 'internal scratch']
  %s0 = inlined_call_operand.hbm [shape: f32[16,128], index: 0, kind: input, shape index: {}]
  %s1 = inlined_call_operand.hbm [shape: f32[16,128], index: 1, kind: input, shape index: {}]
  %s2 = inlined_call_operand.hbm [shape: f32[2,8,128], index: 2, kind: output, shape index: {0}]
  %s3 = inlined_call_operand.hbm [shape: f32[2,8,128], index: 3, kind: output, shape index: {1}]
  %4 = xla_tuple %s2, %s3
  %s5 = sld [smem:[#allocation0]]
  $region61: #{tpu_custom_call.1} parent=0
    _
  %s7 = ssub.s32 1, %s5
  %s8 = scalar_select 0, %s7, %s5
  $region1: #{tpu_custom_call.1} parent=0
    #allocation2 [shape = 'u8[8192]{0}', space=vmem, size = 0x2000, scoped, tag = 'input window, operand 0']
    #allocation3 [shape = 's32[2]{0}', space=sflag, size = 0x8, scoped, tag = 'scoped memory for tpu_custom_call.1']
    #allocation4 [shape = 's32[2]{0}', space=sflag, size = 0x8, scoped, tag = 'scoped memory for tpu_custom_call.1']
    #allocation5 [shape = 'u8[8192]{0}', space=vmem, size = 0x2000, scoped, tag = 'input window, operand 1']
    #allocation6 [shape = 's32[2]{0}', space=sflag, size = 0x8, scoped, tag = 'scoped memory for tpu_custom_call.1']
    #allocation7 [shape = 'u8[8192]{0}', space=vmem, size = 0x2000, scoped, tag = 'output window, operand 0']
    #allocation8 [shape = 'u8[8192]{0}', space=vmem, size = 0x2000, scoped, tag = 'output window, operand 1']
    #allocation9 [shape = 's32[2]{0}', space=sflag, size = 0x8, scoped, tag = 'scoped memory for tpu_custom_call.1']
    %9 = vsyncpa [#allocation3], 0
    %s10 = scalar_lea.sflag [#allocation3], 1
    %11 = vsyncpa %s10, 0
    %12 = vsyncpa [#allocation6], 0
    %s13 = scalar_lea.sflag [#allocation6], 1
    %14 = vsyncpa %s13, 0
    %15 = vsyncpa [#allocation4], 0
    %s16 = scalar_lea.sflag [#allocation4], 1
    %17 = vsyncpa %s16, 0
    %18 = vsyncpa [#allocation9], 0
    %s19 = scalar_lea.sflag [#allocation9], 1
    %20 = vsyncpa %s19, 0
    loop: start=0, step=1, limit=4
    $region2: #{tpu_custom_call.1} parent=1 // loop_pre_header
      _
    $region3: #{tpu_custom_call.1} parent=1 // loop_header
      %s22 = sphi 0, %s26
      %p23 = scmp.ge.s32.totalorder %s22, 4
      %s29 = sphi 0, %s41
      %s30 = sphi 0, %s37
      %s31 = sphi 0, %s29
      %s32 = sphi 0, %s30
      %s33 = sphi 0, %s31
      %s34 = sphi 0, %s32
      %s46 = sphi 0, %s48
      %s49 = sphi 0, %s46
      %s50 = sphi 0, %s49
      %s66 = sphi 0, %s50
      %s74 = sphi 0, %s76
      %s77 = sphi 0, %s74
      %s78 = sphi 0, %s77
      %s94 = sphi 0, %s78
      %s100 = sphi 0, %s102
      %s103 = sphi 0, %s100
      %s104 = sphi 0, %s103
      %s120 = sphi 0, %s104
      %s126 = sphi 0, %s128
      %s129 = sphi 0, %s126
      %s130 = sphi 0, %s129
      %s146 = sphi 0, %s130
    $region4: #{tpu_custom_call.1} parent=1 // loop_header_branch
      %25 = sbr.rel (%p23) target = $region8
    $region5: #{tpu_custom_call.1} parent=1 // loop_body
      %s27 = ssub.s32 %s22, 1
      %s28 = ssub.s32 %s22, 2
      %s35 = sadd.s32 1, %s30
      %p36 = scmp.ge.s32.totalorder %s35, 1
      %s37 = scalar_select %p36, 0, %s35
      %s38 = sadd.s32 1, %s29
      %s39 = scalar_select %p36, %s38, %s29
      %p40 = scmp.ge.s32.totalorder %s39, 2
      %s41 = scalar_select %p40, 0, %s39
      %s42 = sadd.s32 %s29, %s30
      %s43 = sadd.s32 %s41, %s37
      %s44 = ssub.s32 %s42, %s43
      %p45 = scmp.eq.s32.totalorder %s44, 0
      %s47 = sadd.s32 %s46, 1
      %s48 = scalar_select %p45, %s46, %s47
      %p51 = pneg %p45
      %p52 = scmp.eq.s32.totalorder %s22, 1
      %p53 = por %p51, %p52
      %p54 = scmp.ne.s32.totalorder %s46, %s49
      %p55 = scmp.eq.s32.totalorder %s22, 0
      %p56 = por %p54, %p55
      %p57 = scmp.ne.s32.totalorder %s46, %s49
      %p58 = scmp.eq.s32.totalorder %s27, 1
      %p59 = por %p57, %p58
      %p60 = scmp.ne.s32.totalorder %s49, %s50
      %p61 = scmp.eq.s32.totalorder %s27, 0
      %p62 = por %p60, %p61
      %p63 = scmp.ne.s32.totalorder %s49, %s50
      %p64 = scmp.eq.s32.totalorder %s28, 1
      %p65 = por %p63, %p64
      %p67 = scmp.ne.s32.totalorder %s50, %s66
      %p68 = scmp.eq.s32.totalorder %s28, 0
      %p69 = por %p67, %p68
      %s70 = sadd.s32 %s29, %s30
      %s71 = sadd.s32 %s41, %s37
      %s72 = ssub.s32 %s70, %s71
      %p73 = scmp.eq.s32.totalorder %s72, 0
      %s75 = sadd.s32 %s74, 1
      %s76 = scalar_select %p73, %s74, %s75
      %p79 = pneg %p73
      %p80 = scmp.eq.s32.totalorder %s22, 1
      %p81 = por %p79, %p80
      %p82 = scmp.ne.s32.totalorder %s74, %s77
      %p83 = scmp.eq.s32.totalorder %s22, 0
      %p84 = por %p82, %p83
      %p85 = scmp.ne.s32.totalorder %s74, %s77
      %p86 = scmp.eq.s32.totalorder %s27, 1
      %p87 = por %p85, %p86
      %p88 = scmp.ne.s32.totalorder %s77, %s78
      %p89 = scmp.eq.s32.totalorder %s27, 0
      %p90 = por %p88, %p89
      %p91 = scmp.ne.s32.totalorder %s77, %s78
      %p92 = scmp.eq.s32.totalorder %s28, 1
      %p93 = por %p91, %p92
      %p95 = scmp.ne.s32.totalorder %s78, %s94
      %p96 = scmp.eq.s32.totalorder %s28, 0
      %p97 = por %p95, %p96
      %s98 = ssub.s32 %s29, %s41
      %p99 = scmp.eq.s32.totalorder %s98, 0
      %s101 = sadd.s32 %s100, 1
      %s102 = scalar_select %p99, %s100, %s101
      %p105 = pneg %p99
      %p106 = scmp.eq.s32.totalorder %s22, 1
      %p107 = por %p105, %p106
      %p108 = scmp.ne.s32.totalorder %s100, %s103
      %p109 = scmp.eq.s32.totalorder %s22, 0
      %p110 = por %p108, %p109
      %p111 = scmp.ne.s32.totalorder %s100, %s103
      %p112 = scmp.eq.s32.totalorder %s27, 1
      %p113 = por %p111, %p112
      %p114 = scmp.ne.s32.totalorder %s103, %s104
      %p115 = scmp.eq.s32.totalorder %s27, 0
      %p116 = por %p114, %p115
      %p117 = scmp.ne.s32.totalorder %s103, %s104
      %p118 = scmp.eq.s32.totalorder %s28, 1
      %p119 = por %p117, %p118
      %p121 = scmp.ne.s32.totalorder %s104, %s120
      %p122 = scmp.eq.s32.totalorder %s28, 0
      %p123 = por %p121, %p122
      %s124 = ssub.s32 %s29, %s41
      %p125 = scmp.eq.s32.totalorder %s124, 0
      %s127 = sadd.s32 %s126, 1
      %s128 = scalar_select %p125, %s126, %s127
      %p131 = pneg %p125
      %p132 = scmp.eq.s32.totalorder %s22, 1
      %p133 = por %p131, %p132
      %p134 = scmp.ne.s32.totalorder %s126, %s129
      %p135 = scmp.eq.s32.totalorder %s22, 0
      %p136 = por %p134, %p135
      %p137 = scmp.ne.s32.totalorder %s126, %s129
      %p138 = scmp.eq.s32.totalorder %s27, 1
      %p139 = por %p137, %p138
      %p140 = scmp.ne.s32.totalorder %s129, %s130
      %p141 = scmp.eq.s32.totalorder %s27, 0
      %p142 = por %p140, %p141
      %p143 = scmp.ne.s32.totalorder %s129, %s130
      %p144 = scmp.eq.s32.totalorder %s28, 1
      %p145 = por %p143, %p144
      %p147 = scmp.ne.s32.totalorder %s130, %s146
      %p148 = scmp.eq.s32.totalorder %s28, 0
      %p149 = por %p147, %p148
      %p150 = scmp.le.s32.totalorder 1, %s22
      %p151 = scmp.lt.s32.totalorder %s22, 3
      %p152 = pnand %p150, %p151
      %p153 = pneg %p152
      // Predicated region
      $region9: #{tpu_custom_call.1} parent=5 // pred_check
        _
      $region10: #{tpu_custom_call.1} parent=5 // pred_check_branch
        %155 = sbr.rel (%p152) target = $region12
      $region11: #{tpu_custom_call.1} parent=5 // pred_region
        %s156 = ssub.s32 %s22, 1
      $region12: #{tpu_custom_call.1} parent=5 // pred_fallthru
        _
      %p157 = scmp.lt.s32.totalorder %s22, 2
      // Predicated region
      $region13: #{tpu_custom_call.1} parent=5 // pred_check
        %p158 = pneg %p157
      $region14: #{tpu_custom_call.1} parent=5 // pred_check_branch
        %160 = sbr.rel (%p158) target = $region16
      $region15: #{tpu_custom_call.1} parent=5 // pred_region
        // Predicated region
        $region17: #{tpu_custom_call.1} parent=15 // pred_check
          %p161 = pneg %p56
        $region18: #{tpu_custom_call.1} parent=15 // pred_check_branch
          %163 = sbr.rel (%p161) target = $region20
        $region19: #{tpu_custom_call.1} parent=15 // pred_region
          %s164 = sand.u32 %s46, 1
          %s165 = scalar_lea.sflag [#allocation3], %s164
          %s166 = sand.u32 %s46, 1
          %s167 = smul.addr %s166, 8
          %s168 = scalar_lea.vmem [#allocation2], %s167
          %s169 = sadd.s32 %s29, %s30
          %s171 = ssub.s32 128, 128
          %172 = vsyncadd %s165, %s171
          %s173 = smul.addr %s169, 128
          %s174 = scalar_lea.hbm %s0, %s173
          %s176 = sshll.u32 %s168, 4
          %s177 = int_to_ptr.vmem [resolvable:$true] %s176
          %179 = dma.hbm_to_vmem [thread:$0]  %s174, 128, %s177, %s165
        $region20: #{tpu_custom_call.1} parent=15 // pred_fallthru
          _
        // Predicated region
        $region21: #{tpu_custom_call.1} parent=15 // pred_check
          %p180 = pneg %p84
        $region22: #{tpu_custom_call.1} parent=15 // pred_check_branch
          %182 = sbr.rel (%p180) target = $region24
        $region23: #{tpu_custom_call.1} parent=15 // pred_region
          %s183 = sand.u32 %s74, 1
          %s184 = scalar_lea.sflag [#allocation6], %s183
          %s185 = sand.u32 %s74, 1
          %s186 = smul.addr %s185, 8
          %s187 = scalar_lea.vmem [#allocation5], %s186
          %s188 = sadd.s32 %s29, %s30
          %s190 = ssub.s32 128, 128
          %191 = vsyncadd %s184, %s190
          %s192 = smul.addr %s188, 128
          %s193 = scalar_lea.hbm %s1, %s192
          %s195 = sshll.u32 %s187, 4
          %s196 = int_to_ptr.vmem [resolvable:$true] %s195
          %198 = dma.hbm_to_vmem [thread:$0]  %s193, 128, %s196, %s184
        $region24: #{tpu_custom_call.1} parent=15 // pred_fallthru
          _
      $region16: #{tpu_custom_call.1} parent=5 // pred_fallthru
        _
      %p199 = scmp.le.s32.totalorder 1, %s22
      %p200 = scmp.lt.s32.totalorder %s22, 3
      %p201 = pnand %p199, %p200
      %p202 = pneg %p201
      // Predicated region
      $region25: #{tpu_custom_call.1} parent=5 // pred_check
        _
      $region26: #{tpu_custom_call.1} parent=5 // pred_check_branch
        %204 = sbr.rel (%p201) target = $region28
      $region27: #{tpu_custom_call.1} parent=5 // pred_region
        %s205 = ssub.s32 %s22, 1
        %s206 = sand.u32 %s49, 1
        %s207 = scalar_lea.sflag [#allocation3], %s206
        %s208 = sand.u32 %s49, 1
        %s209 = smul.addr %s208, 8
        %s210 = scalar_lea.vmem [#allocation2], %s209
        // Predicated region
        $region29: #{tpu_custom_call.1} parent=27 // pred_check
          %p211 = pneg %p62
        $region30: #{tpu_custom_call.1} parent=27 // pred_check_branch
          %213 = sbr.rel (%p211) target = $region32
        $region31: #{tpu_custom_call.1} parent=27 // pred_region
          %214 = dma.done %s207, 128
        $region32: #{tpu_custom_call.1} parent=27 // pred_fallthru
          _
        %s215 = sand.u32 %s77, 1
        %s216 = scalar_lea.sflag [#allocation6], %s215
        %s217 = sand.u32 %s77, 1
        %s218 = smul.addr %s217, 8
        %s219 = scalar_lea.vmem [#allocation5], %s218
        // Predicated region
        $region33: #{tpu_custom_call.1} parent=27 // pred_check
          %p220 = pneg %p90
        $region34: #{tpu_custom_call.1} parent=27 // pred_check_branch
          %222 = sbr.rel (%p220) target = $region36
        $region35: #{tpu_custom_call.1} parent=27 // pred_region
          %223 = dma.done %s216, 128
        $region36: #{tpu_custom_call.1} parent=27 // pred_fallthru
          _
        %s224 = sand.u32 %s49, 1
        %s225 = scalar_lea.sflag [#allocation3], %s224
        %s226 = sand.u32 %s49, 1
        %s227 = smul.addr %s226, 8
        %s228 = scalar_lea.vmem [#allocation2], %s227
        %p229 = pneg %p62
        %p230 = pneg %p59
        %s231 = sand.u32 %s77, 1
        %s232 = scalar_lea.sflag [#allocation6], %s231
        %s233 = sand.u32 %s77, 1
        %s234 = smul.addr %s233, 8
        %s235 = scalar_lea.vmem [#allocation5], %s234
        %p236 = pneg %p90
        %p237 = pneg %p87
        %p238 = pneg %p116
        %p239 = pneg %p113
        %s240 = sand.u32 %s103, 1
        %s241 = scalar_lea.sflag [#allocation4], %s240
        %s242 = sand.u32 %s103, 1
        %s243 = smul.addr %s242, 8
        %s244 = scalar_lea.vmem [#allocation7], %s243
        %p245 = pneg %p142
        %p246 = pneg %p139
        %s247 = sand.u32 %s129, 1
        %s248 = scalar_lea.sflag [#allocation9], %s247
        %s249 = sand.u32 %s129, 1
        %s250 = smul.addr %s249, 8
        %s251 = scalar_lea.vmem [#allocation8], %s250
        %s252 = sadd.s32 %s31, %s32
        %s253 = sadd.s32 %s31, %s32
        %p254 = scmp.eq.s32.totalorder %s32, 0
        // Predicated region
        $region37: #{tpu_custom_call.1} parent=27 // pred_check
          %p255 = pneg %p254
        $region38: #{tpu_custom_call.1} parent=27 // pred_check_branch
          %257 = sbr.rel (%p255) target = $region40
        $region39: #{tpu_custom_call.1} parent=27 // pred_region
          %258 = vst [vmem:[%s244] sm:$0xff] 0.0
          %259 = vst [vmem:[%s251] sm:$0xff] 0.0
        $region40: #{tpu_custom_call.1} parent=27 // pred_fallthru
          _
        %v260 = vld [vmem:[%s210] sm:$0xff]
        %v261 = vld [vmem:[%s219] sm:$0xff]
        %v262 = vsub.f32 1.0, %v260
        %v263 = vsub.f32 1.0, %v261
        %vm264 = vcmp.ne.f32.partialorder %v261, -1.0
        %vm265 = vcmp.eq.f32.partialorder %v261, 1.0
        %v266 = vlog2.pop %v260
        %v267 = vmul.f32 %v266, 0.6931472
        %v268 = vmax.f32 %v267, -100.0
        %v269 = vlog2.pop %v262
        %v270 = vmul.f32 %v269, 0.6931472
        %v271 = vmax.f32 %v270, -100.0
        %v272 = vmul.f32 %v261, %v268
        %v273 = vmul.f32 %v263, %v271
        %v274 = vadd.f32 %v272, %v273
        %v275 = vsub.f32 0.0, %v274
        %v276 = vmul.f32 %v260, %v260
        %v277 = vmul.f32 %v262, %v262
        %v278 = vmul.f32 %v261, 0.25
        %v279 = vmul.f32 %v278, %v277
        %v280 = vmul.f32 %v263, 0.75
        %v281 = vmul.f32 %v280, %v276
        %v282 = vadd.f32 %v279, %v281
        %v283 = vmul.f32 %v282, %v275
        %v284 = vsel %vm264, %v283, 0.0
        %v285 = vsel %vm265, 1.0, 0.0
        %v286 = vadd.f32 %v284, 0.0
        %v287 = vadd.f32 %v285, 0.0
        %v288 = vld [vmem:[%s244] sm:$0xff]
        %v289 = vadd.f32 %v288, %v286
        %290 = vst [vmem:[%s244] sm:$0xff] %v289
        %v291 = vld [vmem:[%s251] sm:$0xff]
        %v292 = vadd.f32 %v291, %v287
        %293 = vst [vmem:[%s251] sm:$0xff] %v292
        %s294 = sand.u32 %s103, 1
        %s295 = scalar_lea.sflag [#allocation4], %s294
        %s296 = sand.u32 %s103, 1
        %s297 = smul.addr %s296, 8
        %s298 = scalar_lea.vmem [#allocation7], %s297
        %s299 = sand.u32 %s129, 1
        %s300 = scalar_lea.sflag [#allocation9], %s299
        %s301 = sand.u32 %s129, 1
        %s302 = smul.addr %s301, 8
        %s303 = scalar_lea.vmem [#allocation8], %s302
        // Predicated region
        $region41: #{tpu_custom_call.1} parent=27 // pred_check
          %p304 = pneg %p113
        $region42: #{tpu_custom_call.1} parent=27 // pred_check_branch
          %306 = sbr.rel (%p304) target = $region44
        $region43: #{tpu_custom_call.1} parent=27 // pred_region
          %s308 = ssub.s32 128, 128
          %309 = vsyncadd %s295, %s308
          %s310 = smul.addr %s31, 128
          %s311 = scalar_lea.hbm %s2, %s310
          %s313 = sshll.u32 %s298, 4
          %s314 = int_to_ptr.vmem [resolvable:$true] %s313
          %316 = dma.vmem_to_hbm [thread:$0]  %s314, 128, %s311, %s295
        $region44: #{tpu_custom_call.1} parent=27 // pred_fallthru
          _
        // Predicated region
        $region45: #{tpu_custom_call.1} parent=27 // pred_check
          %p317 = pneg %p139
        $region46: #{tpu_custom_call.1} parent=27 // pred_check_branch
          %319 = sbr.rel (%p317) target = $region48
        $region47: #{tpu_custom_call.1} parent=27 // pred_region
          %s321 = ssub.s32 128, 128
          %322 = vsyncadd %s300, %s321
          %s323 = smul.addr %s31, 128
          %s324 = scalar_lea.hbm %s3, %s323
          %s326 = sshll.u32 %s303, 4
          %s327 = int_to_ptr.vmem [resolvable:$true] %s326
          %329 = dma.vmem_to_hbm [thread:$0]  %s327, 128, %s324, %s300
        $region48: #{tpu_custom_call.1} parent=27 // pred_fallthru
          _
      $region28: #{tpu_custom_call.1} parent=5 // pred_fallthru
        _
      %p330 = scmp.le.s32.totalorder 2, %s22
      // Predicated region
      $region49: #{tpu_custom_call.1} parent=5 // pred_check
        %p331 = pneg %p330
      $region50: #{tpu_custom_call.1} parent=5 // pred_check_branch
        %333 = sbr.rel (%p331) target = $region52
      $region51: #{tpu_custom_call.1} parent=5 // pred_region
        %s334 = ssub.s32 %s22, 2
        // Predicated region
        $region53: #{tpu_custom_call.1} parent=51 // pred_check
          %p335 = pneg %p119
        $region54: #{tpu_custom_call.1} parent=51 // pred_check_branch
          %337 = sbr.rel (%p335) target = $region56
        $region55: #{tpu_custom_call.1} parent=51 // pred_region
          %s338 = sand.u32 %s104, 1
          %s339 = scalar_lea.sflag [#allocation4], %s338
          %s340 = sand.u32 %s104, 1
          %s341 = smul.addr %s340, 8
          %s342 = scalar_lea.vmem [#allocation7], %s341
          %343 = dma.done %s339, 128
        $region56: #{tpu_custom_call.1} parent=51 // pred_fallthru
          _
        // Predicated region
        $region57: #{tpu_custom_call.1} parent=51 // pred_check
          %p344 = pneg %p145
        $region58: #{tpu_custom_call.1} parent=51 // pred_check_branch
          %346 = sbr.rel (%p344) target = $region60
        $region59: #{tpu_custom_call.1} parent=51 // pred_region
          %s347 = sand.u32 %s130, 1
          %s348 = scalar_lea.sflag [#allocation9], %s347
          %s349 = sand.u32 %s130, 1
          %s350 = smul.addr %s349, 8
          %s351 = scalar_lea.vmem [#allocation8], %s350
          %352 = dma.done %s348, 128
        $region60: #{tpu_custom_call.1} parent=51 // pred_fallthru
          _
      $region52: #{tpu_custom_call.1} parent=5 // pred_fallthru
        _
    $region6: #{tpu_custom_call.1} parent=1 // loop_footer
      %s26 = sadd.s32 1, %s22
    $region7: #{tpu_custom_call.1} parent=1 // loop_footer_branch
      %21 = sbr.rel target = $region3
    $region8: #{tpu_custom_call.1} parent=1 // loop_exit
      _
    %353 = vsyncpa [#allocation3], 1
    %s354 = scalar_lea.sflag [#allocation3], 1
    %355 = vsyncpa %s354, 1
    %356 = vsyncpa [#allocation6], 1
    %s357 = scalar_lea.sflag [#allocation6], 1
    %358 = vsyncpa %s357, 1
    %359 = vsyncpa [#allocation4], 1
    %s360 = scalar_lea.sflag [#allocation4], 1
    %361 = vsyncpa %s360, 1
    %362 = vsyncpa [#allocation9], 1
    %s363 = scalar_lea.sflag [#allocation9], 1
    %364 = vsyncpa %s363, 1

</llo_original>
